<compile_context>
chip_gen: v5e
topology: v5e:2x2
jax: 0.10.0
libtpu: 0.0.40
codegen_flags: <defaults>
</compile_context>

<pallas_src>
import functools

import jax
import jax.numpy as jnp
from jax.experimental import pallas as pl
from jax.experimental.pallas import tpu as pltpu


def _round_up(x, m):
    return (x + m - 1) // m * m


def _support_kernel(x_ref, w_ref, s_ref):
    # support_tile = X_tile @ W   (f32 accumulation, stored bf16)
    s_ref[...] = jnp.dot(
        x_ref[...], w_ref[...], preferred_element_type=jnp.float32
    ).astype(s_ref.dtype)


def _aggregate_kernel(adj_ref, s_ref, b_ref, out_ref):
    # out_tile = adj_tile @ support + bias   (bf16 operands, f32 accumulation)
    out = jnp.dot(adj_ref[...], s_ref[...], preferred_element_type=jnp.float32)
    out = out + b_ref[...]  # bias broadcasts over the node (row) axis
    out_ref[...] = out.astype(out_ref.dtype)


@functools.partial(jax.jit, static_argnames=("tile_n",))
def gcn_forward(infeatn, adj, weight, bias, *, tile_n=256):
    N, f_in = infeatn.shape
    f_out = weight.shape[1]
    assert adj.shape == (N, N)

    # ---- padding: lane-dense output, row-tiled grid -----------------------
    f_out_p = _round_up(f_out, 128)
    tile = min(tile_n, _round_up(N, 8))
    # keep the double-buffered bf16 adj row tile within a ~32 MiB budget
    while tile > 8 and 2 * tile * _round_up(N, tile) * 2 > (32 << 20):
        tile //= 2
    tile = max(8, _round_up(tile, 8))
    N_p = _round_up(N, tile)

    x = jnp.pad(infeatn, ((0, N_p - N), (0, 0)))
    a = jnp.pad(adj, ((0, N_p - N), (0, N_p - N))).astype(jnp.bfloat16)
    w = jnp.pad(weight, ((0, 0), (0, f_out_p - f_out)))
    b2d = jnp.pad(bias, (0, f_out_p - f_out)).reshape(1, f_out_p).astype(jnp.float32)

    grid = (N_p // tile,)

    # ---- stage 1: support = X @ W  (row-parallel, bf16 output) ------------
    s1_vmem = (2 * tile * f_in * 4          # X row tiles (double buffer)
               + f_in * f_out_p * 4         # W (resident)
               + 2 * tile * f_out_p * 2     # support tiles (double buffer)
               + (2 << 20))                 # headroom
    support = pl.pallas_call(
        _support_kernel,
        out_shape=jax.ShapeDtypeStruct((N_p, f_out_p), jnp.bfloat16),
        grid_spec=pltpu.PrefetchScalarGridSpec(
            num_scalar_prefetch=0,
            grid=grid,
            in_specs=[
                pl.BlockSpec((tile, f_in), lambda i: (i, 0)),     # X row tile
                pl.BlockSpec((f_in, f_out_p), lambda i: (0, 0)),  # W (resident)
            ],
            out_specs=pl.BlockSpec((tile, f_out_p), lambda i: (i, 0)),
        ),
        compiler_params=pltpu.CompilerParams(
            dimension_semantics=("parallel",),
            vmem_limit_bytes=min(s1_vmem, 64 << 20),
        ),
    )(x, w)

    # ---- stage 2: out = adj @ support + bias  (row-parallel) --------------
    s2_vmem = (2 * tile * N_p * 2           # adj row tiles (bf16, double buffer)
               + N_p * f_out_p * 2          # support slab (resident, bf16)
               + 2 * f_out_p * 4            # bias
               + 2 * tile * f_out_p * 4     # output tiles (double buffer)
               + (2 << 20))                 # headroom
    out_p = pl.pallas_call(
        _aggregate_kernel,
        out_shape=jax.ShapeDtypeStruct((N_p, f_out_p), infeatn.dtype),
        grid_spec=pltpu.PrefetchScalarGridSpec(
            num_scalar_prefetch=0,
            grid=grid,
            in_specs=[
                pl.BlockSpec((tile, N_p), lambda i: (i, 0)),       # adj row tile
                pl.BlockSpec((N_p, f_out_p), lambda i: (0, 0)),    # support (resident)
                pl.BlockSpec((1, f_out_p), lambda i: (0, 0)),      # bias
            ],
            out_specs=pl.BlockSpec((tile, f_out_p), lambda i: (i, 0)),
        ),
        compiler_params=pltpu.CompilerParams(
            dimension_semantics=("parallel",),
            vmem_limit_bytes=min(s2_vmem, 64 << 20),
        ),
    )(a, support, b2d)

    # slice off row / feature padding
    return out_p[:N, :f_out]


if __name__ == "__main__":
    # Small deterministic example: N=64 nodes, in_features=32, out_features=32.
    N, F_IN, F_OUT = 64, 32, 32
    key = jax.random.PRNGKey(0)
    k1, k2, k3, k4 = jax.random.split(key, 4)

    infeatn = jax.random.normal(k1, (N, F_IN), dtype=jnp.float32)
    # Dense (row-normalized) adjacency, like a normalized graph adjacency.
    adj_raw = jax.random.uniform(k2, (N, N), dtype=jnp.float32)
    adj = adj_raw / jnp.sum(adj_raw, axis=-1, keepdims=True)
    # Deterministic parameter init (module __init__: weight [F_IN,F_OUT], bias [F_OUT]).
    weight = jax.random.normal(k3, (F_IN, F_OUT), dtype=jnp.float32) * 0.1
    bias = jax.random.normal(k4, (F_OUT,), dtype=jnp.float32) * 0.1

    out = gcn_forward(infeatn, adj, weight, bias)
    out = jax.block_until_ready(out)

    # Reference check (plain JAX, f32). adj/support are streamed in bf16 with
    # f32 accumulation in the kernel -> use a loose tolerance.
    ref = adj @ (infeatn @ weight) + bias
    assert out.shape == (N, F_OUT)
    assert jnp.allclose(out, ref, atol=2e-2, rtol=2e-2), "mismatch vs reference"

    print("KERNEL_OK")
</pallas_src>

<mosaic_0001>
module attributes {stable_mosaic.version = 11 : i64} {
  func.func @_support_kernel(%arg0: i32, %arg1: memref<64x32xf32, #tpu.memory_space<vmem>>, %arg2: memref<32x128xf32, #tpu.memory_space<vmem>>, %arg3: memref<64x128xbf16, #tpu.memory_space<vmem>>) attributes {dimension_semantics = [#tpu.dimension_semantics<parallel>], iteration_bounds = array<i64: 1>, scalar_prefetch = 0 : i64, scratch_operands = 0 : i64, tpu.core_type = #tpu.core_type<tc>, window_params = [{transform_indices = @transform_0, window_bounds = array<i64: 64, 32>}, {pipeline_mode = #tpu.pipeline_mode<synchronous>, transform_indices = @transform_1, window_bounds = array<i64: 32, 128>}, {transform_indices = @transform_2, window_bounds = array<i64: 64, 128>}]} {
    %c0 = arith.constant 0 : index
    %c0_0 = arith.constant 0 : index
    %0 = vector.load %arg1[%c0, %c0_0] : memref<64x32xf32, #tpu.memory_space<vmem>>, vector<64x32xf32>
    %c0_1 = arith.constant 0 : index
    %c0_2 = arith.constant 0 : index
    %1 = vector.load %arg2[%c0_1, %c0_2] : memref<32x128xf32, #tpu.memory_space<vmem>>, vector<32x128xf32>
    %cst = arith.constant dense<0.000000e+00> : vector<64x128xf32>
    %2 = tpu.matmul %0, %1, %cst {dimension_numbers = #tpu.dot_dimension_numbers<[1], [0], [0], [1], [0, 0, 1, 1], [], []>} : vector<64x32xf32>, vector<32x128xf32>, vector<64x128xf32> -> vector<64x128xf32>
    %3 = arith.truncf %2 : vector<64x128xf32> to vector<64x128xbf16>
    %c0_3 = arith.constant 0 : index
    %c0_4 = arith.constant 0 : index
    %4 = vector.load %arg3[%c0_3, %c0_4] : memref<64x128xbf16, #tpu.memory_space<vmem>>, vector<64x128xbf16>
    tpu.vector_store %arg3[%c0_3, %c0_4], %3 {strides = array<i32>} : memref<64x128xbf16, #tpu.memory_space<vmem>>, vector<64x128xbf16>,
    return
  }
  func.func @transform_0(%arg0: i32) -> (i32, i32) {
    %c0_i32 = arith.constant 0 : i32
    %c0_i32_0 = arith.constant 0 : i32
    return %arg0, %c0_i32 : i32, i32
  }
  func.func @transform_1(%arg0: i32) -> (i32, i32) {
    %c0_i32 = arith.constant 0 : i32
    %c0_i32_0 = arith.constant 0 : i32
    %c0_i32_1 = arith.constant 0 : i32
    return %c0_i32, %c0_i32_0 : i32, i32
  }
  func.func @transform_2(%arg0: i32) -> (i32, i32) {
    %c0_i32 = arith.constant 0 : i32
    %c0_i32_0 = arith.constant 0 : i32
    return %arg0, %c0_i32 : i32, i32
  }
}

module attributes {stable_mosaic.version = 11 : i64} {
  func.func @_aggregate_kernel(%arg0: i32, %arg1: memref<64x64xbf16, #tpu.memory_space<vmem>>, %arg2: memref<64x128xbf16, #tpu.memory_space<vmem>>, %arg3: memref<1x128xf32, #tpu.memory_space<vmem>>, %arg4: memref<64x128xf32, #tpu.memory_space<vmem>>) attributes {dimension_semantics = [#tpu.dimension_semantics<parallel>], iteration_bounds = array<i64: 1>, scalar_prefetch = 0 : i64, scratch_operands = 0 : i64, tpu.core_type = #tpu.core_type<tc>, window_params = [{transform_indices = @transform_0, window_bounds = array<i64: 64, 64>}, {pipeline_mode = #tpu.pipeline_mode<synchronous>, transform_indices = @transform_1, window_bounds = array<i64: 64, 128>}, {pipeline_mode = #tpu.pipeline_mode<synchronous>, transform_indices = @transform_2, window_bounds = array<i64: 1, 128>}, {transform_indices = @transform_3, window_bounds = array<i64: 64, 128>}]} {
    %c0 = arith.constant 0 : index
    %c0_0 = arith.constant 0 : index
    %0 = vector.load %arg1[%c0, %c0_0] : memref<64x64xbf16, #tpu.memory_space<vmem>>, vector<64x64xbf16>
    %c0_1 = arith.constant 0 : index
    %c0_2 = arith.constant 0 : index
    %1 = vector.load %arg2[%c0_1, %c0_2] : memref<64x128xbf16, #tpu.memory_space<vmem>>, vector<64x128xbf16>
    %cst = arith.constant dense<0.000000e+00> : vector<64x128xf32>
    %2 = tpu.matmul %0, %1, %cst {dimension_numbers = #tpu.dot_dimension_numbers<[1], [0], [0], [1], [0, 0, 1, 1], [], []>} : vector<64x64xbf16>, vector<64x128xbf16>, vector<64x128xf32> -> vector<64x128xf32>
    %c0_3 = arith.constant 0 : index
    %c0_4 = arith.constant 0 : index
    %3 = vector.load %arg3[%c0_3, %c0_4] : memref<1x128xf32, #tpu.memory_space<vmem>>, vector<1x128xf32>
    %4 = vector.broadcast %3 : vector<1x128xf32> to vector<64x128xf32>
    %5 = arith.addf %2, %4 : vector<64x128xf32>
    %c0_5 = arith.constant 0 : index
    %c0_6 = arith.constant 0 : index
    %6 = vector.load %arg4[%c0_5, %c0_6] : memref<64x128xf32, #tpu.memory_space<vmem>>, vector<64x128xf32>
    tpu.vector_store %arg4[%c0_5, %c0_6], %5 {strides = array<i32>} : memref<64x128xf32, #tpu.memory_space<vmem>>, vector<64x128xf32>,
    return
  }
  func.func @transform_0(%arg0: i32) -> (i32, i32) {
    %c0_i32 = arith.constant 0 : i32
    %c0_i32_0 = arith.constant 0 : i32
    return %arg0, %c0_i32 : i32, i32
  }
  func.func @transform_1(%arg0: i32) -> (i32, i32) {
    %c0_i32 = arith.constant 0 : i32
    %c0_i32_0 = arith.constant 0 : i32
    %c0_i32_1 = arith.constant 0 : i32
    return %c0_i32, %c0_i32_0 : i32, i32
  }
  func.func @transform_2(%arg0: i32) -> (i32, i32) {
    %c0_i32 = arith.constant 0 : i32
    %c0_i32_0 = arith.constant 0 : i32
    %c0_i32_1 = arith.constant 0 : i32
    return %c0_i32, %c0_i32_0 : i32, i32
  }
  func.func @transform_3(%arg0: i32) -> (i32, i32) {
    %c0_i32 = arith.constant 0 : i32
    %c0_i32_0 = arith.constant 0 : i32
    return %arg0, %c0_i32 : i32, i32
  }
}

</mosaic_0001>

<llo_original>
// kernel: gcn_forward.3
$region0: #{gcn_forward.3}
  #allocation0 [shape = 'u32[]', space=smem, size = 0x4, offset = 0x4, fixed_abs, tag = 'smem constant byte address 0x4 - core index']
  #allocation1 [shape = 'u32[72,128]{1,0:T(1,128)}', space=vmem, size = 0x9000, scoped, tag = 'internal scratch']
  %s0 = inlined_call_operand.vmem [shape: bf16[64,64], index: 0, kind: input, shape index: {}]
  %s1 = inlined_call_operand.vmem [shape: bf16[64,128], index: 1, kind: input, shape index: {}]
  %s2 = inlined_call_operand.vmem [shape: f32[1,128], index: 2, kind: input, shape index: {}]
  %s3 = inlined_call_operand.vmem [shape: f32[64,128], index: 3, kind: output, shape index: {}]
  %s4 = sld [smem:[#allocation0]]
  $region22: #{gcn_forward.3} parent=0
    _
  %s6 = ssub.s32 1, %s4
  %s7 = scalar_select 0, %s6, %s4
  // Predicated region
  $region2: #{gcn_forward.3} parent=0 // pred_check
    _
  $region3: #{gcn_forward.3} parent=0 // pred_check_branch
    %9 = sbr.rel (0) target = $region5
  $region4: #{gcn_forward.3} parent=0 // pred_region
    _
  $region5: #{gcn_forward.3} parent=0 // pred_fallthru
    _
  // Predicated region
  $region6: #{gcn_forward.3} parent=0 // pred_check
    _
  $region7: #{gcn_forward.3} parent=0 // pred_check_branch
    %11 = sbr.rel (0) target = $region9
  $region8: #{gcn_forward.3} parent=0 // pred_region
    _
  $region9: #{gcn_forward.3} parent=0 // pred_fallthru
    _
  // Predicated region
  $region10: #{gcn_forward.3} parent=0 // pred_check
    _
  $region11: #{gcn_forward.3} parent=0 // pred_check_branch
    %13 = sbr.rel (0) target = $region13
  $region12: #{gcn_forward.3} parent=0 // pred_region
    _
  $region13: #{gcn_forward.3} parent=0 // pred_fallthru
    _
  %v15 = vld [vmem:[%s0] sm:$0xf]
  %v16 = vld [vmem:[%s0 + $0x4] sm:$0xf]
  %v17 = vld [vmem:[%s0 + $0x8] sm:$0xf]
  %v18 = vld [vmem:[%s0 + $0xc] sm:$0xf]
  %v19 = vld [vmem:[%s0 + $0x10] sm:$0xf]
  %v20 = vld [vmem:[%s0 + $0x14] sm:$0xf]
  %v21 = vld [vmem:[%s0 + $0x18] sm:$0xf]
  %v22 = vld [vmem:[%s0 + $0x1c] sm:$0xf]
  %v23 = vld [vmem:[%s1] sm:$0xf]
  %v24 = vld [vmem:[%s1 + $0x4] sm:$0xf]
  %v25 = vld [vmem:[%s1 + $0x8] sm:$0xf]
  %v26 = vld [vmem:[%s1 + $0xc] sm:$0xf]
  %v27 = vld [vmem:[%s1 + $0x10] sm:$0xf]
  %v28 = vld [vmem:[%s1 + $0x14] sm:$0xf]
  %v29 = vld [vmem:[%s1 + $0x18] sm:$0xf]
  %v30 = vld [vmem:[%s1 + $0x1c] sm:$0xf]
  %v31 = vld [vmem:[%s2] sm:$0x1]
  %v33 = vperm.slane %v31, 0
  %v43 = vunpack.c.l.b16 %v15
  %v44 = vunpack.c.l.b16 %v16
  %v45 = vunpack.c.l.b16 %v17
  %v46 = vunpack.c.l.b16 %v18
  %v47 = vunpack.c.l.b16 %v19
  %v48 = vunpack.c.l.b16 %v20
  %v49 = vunpack.c.l.b16 %v21
  %v50 = vunpack.c.l.b16 %v22
  %v51 = vpack.c.b16 %v44, %v43
  %v52 = vpack.c.b16 %v46, %v45
  %v53 = vpack.c.b16 %v48, %v47
  %v54 = vpack.c.b16 %v50, %v49
  %v63 = vunpack.c.l.b16 %v23
  %v64 = vunpack.c.l.b16 %v24
  %v65 = vunpack.c.l.b16 %v25
  %v66 = vunpack.c.l.b16 %v26
  %v67 = vunpack.c.l.b16 %v27
  %v68 = vunpack.c.l.b16 %v28
  %v69 = vunpack.c.l.b16 %v29
  %v70 = vunpack.c.l.b16 %v30
  %v71 = vpack.c.b16 %v64, %v63
  %v72 = vpack.c.b16 %v66, %v65
  %v73 = vpack.c.b16 %v68, %v67
  %v74 = vpack.c.b16 %v70, %v69
  %vm79 = vcmask 523264
  %v81 = vsel %vm79, %v51, 0
  %v84 = vsel %vm79, %v52, 0
  %v87 = vsel %vm79, %v53, 0
  %v90 = vsel %vm79, %v54, 0
  %92 = vmatpush.bf16.msra.mxu0 0
  %93 = vmatpush.bf16.msra.mxu0 0
  %94 = vmatpush.bf16.msra.mxu0 0
  %95 = vmatpush.bf16.msra.mxu0 0
  %96 = vmatpush.bf16.msra.mxu0 %v74
  %97 = vmatpush.bf16.msra.mxu0 %v73
  %98 = vmatpush.bf16.msra.mxu0 %v72
  %99 = vmatpush.bf16.msra.mxu0 %v71
  %100 = vmatmul.bf16.gmra.mxu0 %v81
  %v101 = vpop.f32.mrf.mxu0
  %v102 = vadd.f32 %v33, %v101
  %v103 = vpop.f32.mrf.mxu0
  %v104 = vadd.f32 %v33, %v103
  %105 = vmatmul.bf16.gmra.mxu0 %v84
  %v106 = vpop.f32.mrf.mxu0
  %v107 = vadd.f32 %v33, %v106
  %v108 = vpop.f32.mrf.mxu0
  %v109 = vadd.f32 %v33, %v108
  %110 = vmatmul.bf16.gmra.mxu0 %v87
  %v111 = vpop.f32.mrf.mxu0
  %v112 = vadd.f32 %v33, %v111
  %v113 = vpop.f32.mrf.mxu0
  %v114 = vadd.f32 %v33, %v113
  %115 = vmatmul.bf16.gmra.mxu0 %v90
  %v116 = vpop.f32.mrf.mxu0
  %v117 = vadd.f32 %v33, %v116
  %v118 = vpop.f32.mrf.mxu0
  %v119 = vadd.f32 %v33, %v118
  %120 = vdwg.mxu0
  %121 = vst [vmem:[%s3] sm:$0xff] %v102
  %122 = vst [vmem:[%s3 + $0x8] sm:$0xff] %v104
  %123 = vst [vmem:[%s3 + $0x10] sm:$0xff] %v107
  %124 = vst [vmem:[%s3 + $0x18] sm:$0xff] %v109
  %125 = vst [vmem:[%s3 + $0x20] sm:$0xff] %v112
  %126 = vst [vmem:[%s3 + $0x28] sm:$0xff] %v114
  %127 = vst [vmem:[%s3 + $0x30] sm:$0xff] %v117
  %128 = vst [vmem:[%s3 + $0x38] sm:$0xff] %v119
  // Predicated region
  $region14: #{gcn_forward.3} parent=0 // pred_check
    _
  $region15: #{gcn_forward.3} parent=0 // pred_check_branch
    %130 = sbr.rel (0) target = $region17
  $region16: #{gcn_forward.3} parent=0 // pred_region
    _
  $region17: #{gcn_forward.3} parent=0 // pred_fallthru
    _
  // Predicated region
  $region18: #{gcn_forward.3} parent=0 // pred_check
    _
  $region19: #{gcn_forward.3} parent=0 // pred_check_branch
    %132 = sbr.rel (0) target = $region21
  $region20: #{gcn_forward.3} parent=0 // pred_region
    _
  $region21: #{gcn_forward.3} parent=0 // pred_fallthru
    _

// kernel: gcn_forward.2
$region0: #{gcn_forward.2}
  #allocation0 [shape = 'u32[]', space=smem, size = 0x4, offset = 0x4, fixed_abs, tag = 'smem constant byte address 0x4 - core index']
  #allocation1 [shape = 'u32[72,128]{1,0:T(1,128)}', space=vmem, size = 0x9000, scoped, tag = 'internal scratch']
  %s0 = inlined_call_operand.vmem [shape: f32[64,32], index: 0, kind: input, shape index: {}]
  %s1 = inlined_call_operand.vmem [shape: f32[32,128], index: 1, kind: input, shape index: {}]
  %s2 = inlined_call_operand.vmem [shape: bf16[64,128], index: 2, kind: output, shape index: {}]
  %s3 = sld [smem:[#allocation0]]
  $region18: #{gcn_forward.2} parent=0
    _
  %s5 = ssub.s32 1, %s3
  %s6 = scalar_select 0, %s5, %s3
  // Predicated region
  $region2: #{gcn_forward.2} parent=0 // pred_check
    _
  $region3: #{gcn_forward.2} parent=0 // pred_check_branch
    %8 = sbr.rel (0) target = $region5
  $region4: #{gcn_forward.2} parent=0 // pred_region
    _
  $region5: #{gcn_forward.2} parent=0 // pred_fallthru
    _
  // Predicated region
  $region6: #{gcn_forward.2} parent=0 // pred_check
    _
  $region7: #{gcn_forward.2} parent=0 // pred_check_branch
    %10 = sbr.rel (0) target = $region9
  $region8: #{gcn_forward.2} parent=0 // pred_region
    _
  $region9: #{gcn_forward.2} parent=0 // pred_fallthru
    _
  %v11 = vld [vmem:[%s0] sm:$0xff]
  %v12 = vld [vmem:[%s0 + $0x8] sm:$0xff]
  %v13 = vld [vmem:[%s0 + $0x10] sm:$0xff]
  %v14 = vld [vmem:[%s0 + $0x18] sm:$0xff]
  %v15 = vld [vmem:[%s0 + $0x20] sm:$0xff]
  %v16 = vld [vmem:[%s0 + $0x28] sm:$0xff]
  %v17 = vld [vmem:[%s0 + $0x30] sm:$0xff]
  %v18 = vld [vmem:[%s0 + $0x38] sm:$0xff]
  %v19 = vld [vmem:[%s1] sm:$0xff]
  %v20 = vld [vmem:[%s1 + $0x8] sm:$0xff]
  %v21 = vld [vmem:[%s1 + $0x10] sm:$0xff]
  %v22 = vld [vmem:[%s1 + $0x18] sm:$0xff]
  %vm23 = vcmask 261120
  %v25 = vsel %vm23, %v11, 0
  %v28 = vsel %vm23, %v12, 0
  %v31 = vsel %vm23, %v13, 0
  %v34 = vsel %vm23, %v14, 0
  %v37 = vsel %vm23, %v15, 0
  %v40 = vsel %vm23, %v16, 0
  %v43 = vsel %vm23, %v17, 0
  %v46 = vsel %vm23, %v18, 0
  %48 = vmatpush.msra.mxu0 0.0
  %49 = vmatpush.msra.mxu0 0.0
  %50 = vmatpush.msra.mxu0 0.0
  %51 = vmatpush.msra.mxu0 0.0
  %52 = vmatpush.msra.mxu0 0.0
  %53 = vmatpush.msra.mxu0 0.0
  %54 = vmatpush.msra.mxu0 0.0
  %55 = vmatpush.msra.mxu0 0.0
  %56 = vmatpush.msra.mxu0 0.0
  %57 = vmatpush.msra.mxu0 0.0
  %58 = vmatpush.msra.mxu0 0.0
  %59 = vmatpush.msra.mxu0 0.0
  %60 = vmatpush.msra.mxu0 %v22
  %61 = vmatpush.msra.mxu0 %v21
  %62 = vmatpush.msra.mxu0 %v20
  %63 = vmatpush.msra.mxu0 %v19
  %64 = vmatmul.f32.gmra.mxu0 %v25
  %v65 = vpop.f32.mrf.mxu0
  %v66 = vadd.f32 0.0, %v65
  %67 = vmatmul.f32.gmra.mxu0 %v28
  %v68 = vpop.f32.mrf.mxu0
  %v69 = vadd.f32 0.0, %v68
  %70 = vmatmul.f32.gmra.mxu0 %v31
  %v71 = vpop.f32.mrf.mxu0
  %v72 = vadd.f32 0.0, %v71
  %73 = vmatmul.f32.gmra.mxu0 %v34
  %v74 = vpop.f32.mrf.mxu0
  %v75 = vadd.f32 0.0, %v74
  %76 = vmatmul.f32.gmra.mxu0 %v37
  %v77 = vpop.f32.mrf.mxu0
  %v78 = vadd.f32 0.0, %v77
  %79 = vmatmul.f32.gmra.mxu0 %v40
  %v80 = vpop.f32.mrf.mxu0
  %v81 = vadd.f32 0.0, %v80
  %82 = vmatmul.f32.gmra.mxu0 %v43
  %v83 = vpop.f32.mrf.mxu0
  %v84 = vadd.f32 0.0, %v83
  %85 = vmatmul.f32.gmra.mxu0 %v46
  %v86 = vpop.f32.mrf.mxu0
  %v87 = vadd.f32 0.0, %v86
  %88 = vdwg.mxu0
  %v89 = vpack.c.bf16 %v66, %v66
  %v90 = vpack.c.bf16 %v69, %v69
  %v91 = vpack.c.bf16 %v72, %v72
  %v92 = vpack.c.bf16 %v75, %v75
  %v93 = vpack.c.bf16 %v78, %v78
  %v94 = vpack.c.bf16 %v81, %v81
  %v95 = vpack.c.bf16 %v84, %v84
  %v96 = vpack.c.bf16 %v87, %v87
  %97 = vst [vmem:[%s2] sm:$0xf] %v89
  %98 = vst [vmem:[%s2 + $0x4] sm:$0xf] %v90
  %99 = vst [vmem:[%s2 + $0x8] sm:$0xf] %v91
  %100 = vst [vmem:[%s2 + $0xc] sm:$0xf] %v92
  %101 = vst [vmem:[%s2 + $0x10] sm:$0xf] %v93
  %102 = vst [vmem:[%s2 + $0x14] sm:$0xf] %v94
  %103 = vst [vmem:[%s2 + $0x18] sm:$0xf] %v95
  %104 = vst [vmem:[%s2 + $0x1c] sm:$0xf] %v96
  // Predicated region
  $region10: #{gcn_forward.2} parent=0 // pred_check
    _
  $region11: #{gcn_forward.2} parent=0 // pred_check_branch
    %106 = sbr.rel (0) target = $region13
  $region12: #{gcn_forward.2} parent=0 // pred_region
    _
  $region13: #{gcn_forward.2} parent=0 // pred_fallthru
    _
  // Predicated region
  $region14: #{gcn_forward.2} parent=0 // pred_check
    _
  $region15: #{gcn_forward.2} parent=0 // pred_check_branch
    %108 = sbr.rel (0) target = $region17
  $region16: #{gcn_forward.2} parent=0 // pred_region
    _
  $region17: #{gcn_forward.2} parent=0 // pred_fallthru
    _

</llo_original>
